<compile_context>
chip_gen: v6e
topology: v6e:2x2x1
jax: 0.10.0
libtpu: 0.0.40
codegen_flags: <defaults>
</compile_context>

<pallas_src>
import jax
import jax.numpy as jnp
from jax.experimental import pallas as pl
from jax.experimental.pallas import tpu as pltpu

_LANES = 128
_SUBLANES = 8
_MIN_TILE_EDGES = _LANES * _SUBLANES      # 1024 edges = one (8,128) f32 vreg tile


def _stress_kernel(eu2_ref, rd_ref, out_ref):
    """One edge tile: eu2 [T8, 8, 128], rd [T8, 8, 128] -> accumulate into out [8, 128]."""

    @pl.when(pl.program_id(0) == 0)
    def _():
        out_ref[...] = jnp.zeros_like(out_ref)

    eu = jnp.sqrt(eu2_ref[...])                 # [T8, 8, 128]  EUP sqrt
    s = eu * rd_ref[...] - 1.0                  # ((eu - d)/d) == eu/d - 1
    # Reduce the leading (vreg-group) axis in-kernel: plain VPU adds, keeps the
    # resident accumulator at a fixed (8, 128) regardless of tile size.
    out_ref[...] += jnp.sum(s * s, axis=0)      # [8, 128]


def stress(node_pos, edge_index, edge_attr, *, tile_edges=262144):
    """node_pos: [N, D] f32, edge_index: [2, E] int, edge_attr: [E, A] f32 -> scalar f32."""
    node_pos = node_pos.astype(jnp.float32)
    edge_index = edge_index.astype(jnp.int32)
    E = edge_index.shape[1]

    # --- glue (plain JAX): data-dependent gather + squared distance + 1/d ---
    # One XLA fusion writes eu2 [E] and rd [E]; the [D, E] diff never exists.
    # TODO(synk): the gather node_pos[edge_index] is data-dependent indexing
    # that BlockSpec cannot express, so it stays outside the kernel.
    src = jnp.take(node_pos, edge_index[0], axis=0)          # [E, D]
    dst = jnp.take(node_pos, edge_index[1], axis=0)          # [E, D]
    eu2 = jnp.sum(jnp.square(src - dst), axis=1)             # [E]
    rd = 1.0 / edge_attr[:, 0].astype(jnp.float32)           # [E]

    # --- tile sizing: dense (8,128) packing of the edge axis ---
    tile_edges = max(_MIN_TILE_EDGES,
                     (int(tile_edges) // _MIN_TILE_EDGES) * _MIN_TILE_EDGES)
    tile_edges = min(tile_edges, pl.cdiv(E, _MIN_TILE_EDGES) * _MIN_TILE_EDGES)
    steps = pl.cdiv(E, tile_edges)
    E_pad = steps * tile_edges
    pad = E_pad - E

    if pad:
        # eu2 = 1, rd = 1  ->  (sqrt(1)*1 - 1)^2 == 0 exactly for padded edges.
        eu2 = jnp.pad(eu2, (0, pad), constant_values=1.0)
        rd = jnp.pad(rd, (0, pad), constant_values=1.0)

    tile_r8 = tile_edges // _MIN_TILE_EDGES
    n_blocks8 = E_pad // _MIN_TILE_EDGES
    eu2_p = eu2.reshape(n_blocks8, _SUBLANES, _LANES)        # [R8, 8, 128]
    rd_p = rd.reshape(n_blocks8, _SUBLANES, _LANES)          # [R8, 8, 128]

    out = pl.pallas_call(
        _stress_kernel,
        out_shape=jax.ShapeDtypeStruct((_SUBLANES, _LANES), jnp.float32),
        grid_spec=pltpu.PrefetchScalarGridSpec(
            num_scalar_prefetch=0,
            grid=(steps,),
            in_specs=[
                pl.BlockSpec((tile_r8, _SUBLANES, _LANES), lambda i: (i, 0, 0)),
                pl.BlockSpec((tile_r8, _SUBLANES, _LANES), lambda i: (i, 0, 0)),
            ],
            out_specs=pl.BlockSpec((_SUBLANES, _LANES), lambda i: (0, 0)),
        ),
        compiler_params=pltpu.CompilerParams(
            dimension_semantics=("arbitrary",),
        ),
        cost_estimate=pl.CostEstimate(
            flops=4 * E_pad,
            transcendentals=E_pad,
            bytes_accessed=2 * 4 * E_pad + _SUBLANES * _LANES * 4,
        ),
    )(eu2_p, rd_p)

    # Final reduction of the tiny (8, 128) partial slab (done in XLA).
    return jnp.sum(out)


def stress_ref(node_pos, edge_index, edge_attr):
    start = node_pos[edge_index[0]]
    end = node_pos[edge_index[1]]
    eu = jnp.linalg.norm(start - end, axis=1)
    d = edge_attr[:, 0]
    return jnp.sum(jnp.square(jnp.abs(eu - d) / d))


if __name__ == "__main__":
    key = jax.random.PRNGKey(0)

    def make_graph(k, N, D, E, A):
        k1, k2, k3 = jax.random.split(k, 3)
        node_pos = jax.random.normal(k1, (N, D), dtype=jnp.float32)
        edge_index = jax.random.randint(k2, (2, E), 0, N, dtype=jnp.int32)
        edge_attr = jax.random.uniform(k3, (E, A), dtype=jnp.float32,
                                       minval=0.5, maxval=2.0)
        return node_pos, edge_index, edge_attr

    k_small, k_big = jax.random.split(key)

    # Small graph (single tile, heavy padding path).
    np_s, ei_s, ea_s = make_graph(k_small, 16, 2, 30, 2)
    out_s = jax.block_until_ready(stress(np_s, ei_s, ea_s))
    ref_s = stress_ref(np_s, ei_s, ea_s)
    assert jnp.allclose(out_s, ref_s, rtol=1e-4, atol=1e-3), (out_s, ref_s)

    # Medium graph, default (single-step) tiling.
    np_b, ei_b, ea_b = make_graph(k_big, 256, 2, 5000, 3)
    out_b = jax.block_until_ready(stress(np_b, ei_b, ea_b))
    ref_b = stress_ref(np_b, ei_b, ea_b)
    assert jnp.allclose(out_b, ref_b, rtol=1e-4, atol=1e-3), (out_b, ref_b)

    # Same medium graph with a tiny tile to exercise multi-step accumulation.
    out_m = jax.block_until_ready(stress(np_b, ei_b, ea_b, tile_edges=1024))
    assert jnp.allclose(out_m, ref_b, rtol=1e-4, atol=1e-3), (out_m, ref_b)

    print("KERNEL_OK")
</pallas_src>

<mosaic_0001>
module attributes {stable_mosaic.version = 11 : i64} {
  func.func @_stress_kernel(%arg0: i32, %arg1: memref<1x8x128xf32, #tpu.memory_space<vmem>>, %arg2: memref<1x8x128xf32, #tpu.memory_space<vmem>>, %arg3: memref<8x128xf32, #tpu.memory_space<vmem>>) attributes {dimension_semantics = [#tpu.dimension_semantics<arbitrary>], iteration_bounds = array<i64: 1>, scalar_prefetch = 0 : i64, scratch_operands = 0 : i64, tpu.core_type = #tpu.core_type<tc>, window_params = [{transform_indices = @transform_0, window_bounds = array<i64: 1, 8, 128>}, {transform_indices = @transform_1, window_bounds = array<i64: 1, 8, 128>}, {pipeline_mode = #tpu.pipeline_mode<synchronous>, transform_indices = @transform_2, window_bounds = array<i64: 8, 128>}]} {
    %c0_i32 = arith.constant 0 : i32
    %0 = arith.cmpi eq, %arg0, %c0_i32 : i32
    %1 = arith.extui %0 : i1 to i32
    %c0_i32_0 = arith.constant 0 : i32
    %2 = arith.cmpi ne, %1, %c0_i32_0 : i32
    scf.if %2 {
      %cst_11 = arith.constant 0.000000e+00 : f32
      %14 = vector.broadcast %cst_11 : f32 to vector<8x128xf32>
      %c0_12 = arith.constant 0 : index
      %c0_13 = arith.constant 0 : index
      %15 = vector.load %arg3[%c0_12, %c0_13] : memref<8x128xf32, #tpu.memory_space<vmem>>, vector<8x128xf32>
      tpu.vector_store %arg3[%c0_12, %c0_13], %14 {strides = array<i32>} : memref<8x128xf32, #tpu.memory_space<vmem>>, vector<8x128xf32>,
    } else {
    }
    %c0 = arith.constant 0 : index
    %c0_1 = arith.constant 0 : index
    %c0_2 = arith.constant 0 : index
    %3 = vector.load %arg1[%c0, %c0_1, %c0_2] : memref<1x8x128xf32, #tpu.memory_space<vmem>>, vector<1x8x128xf32>
    %4 = math.sqrt %3 : vector<1x8x128xf32>
    %c0_3 = arith.constant 0 : index
    %c0_4 = arith.constant 0 : index
    %c0_5 = arith.constant 0 : index
    %5 = vector.load %arg2[%c0_3, %c0_4, %c0_5] : memref<1x8x128xf32, #tpu.memory_space<vmem>>, vector<1x8x128xf32>
    %6 = arith.mulf %4, %5 : vector<1x8x128xf32>
    %cst = arith.constant 1.000000e+00 : f32
    %7 = vector.broadcast %cst : f32 to vector<1x8x128xf32>
    %8 = arith.subf %6, %7 : vector<1x8x128xf32>
    %c0_6 = arith.constant 0 : index
    %c0_7 = arith.constant 0 : index
    %9 = vector.load %arg3[%c0_6, %c0_7] : memref<8x128xf32, #tpu.memory_space<vmem>>, vector<8x128xf32>
    %10 = arith.mulf %8, %8 : vector<1x8x128xf32>
    %cst_8 = arith.constant dense<0.000000e+00> : vector<8x128xf32>
    %11 = vector.multi_reduction <add>, %10, %cst_8 [0] : vector<1x8x128xf32> to vector<8x128xf32>
    %12 = arith.addf %9, %11 : vector<8x128xf32>
    %c0_9 = arith.constant 0 : index
    %c0_10 = arith.constant 0 : index
    %13 = vector.load %arg3[%c0_9, %c0_10] : memref<8x128xf32, #tpu.memory_space<vmem>>, vector<8x128xf32>
    tpu.vector_store %arg3[%c0_9, %c0_10], %12 {strides = array<i32>} : memref<8x128xf32, #tpu.memory_space<vmem>>, vector<8x128xf32>,
    return
  }
  func.func @transform_0(%arg0: i32) -> (i32, i32, i32) {
    %c0_i32 = arith.constant 0 : i32
    %c0_i32_0 = arith.constant 0 : i32
    %c0_i32_1 = arith.constant 0 : i32
    return %arg0, %c0_i32, %c0_i32_0 : i32, i32, i32
  }
  func.func @transform_1(%arg0: i32) -> (i32, i32, i32) {
    %c0_i32 = arith.constant 0 : i32
    %c0_i32_0 = arith.constant 0 : i32
    %c0_i32_1 = arith.constant 0 : i32
    return %arg0, %c0_i32, %c0_i32_0 : i32, i32, i32
  }
  func.func @transform_2(%arg0: i32) -> (i32, i32) {
    %c0_i32 = arith.constant 0 : i32
    %c0_i32_0 = arith.constant 0 : i32
    %c0_i32_1 = arith.constant 0 : i32
    return %c0_i32, %c0_i32_0 : i32, i32
  }
}

</mosaic_0001>

<llo_original>
// kernel: tpu_custom_call.1
$region0: #{tpu_custom_call.1}
  #allocation0 [shape = 'u32[]', space=smem, size = 0x4, offset = 0x4, fixed_abs, tag = 'smem constant byte address 0x4 - core index']
  #allocation1 [shape = 'u32[144,128]{1,0:T(1,128)}', space=vmem, size = 0x12000, scoped, tag = 'internal scratch']
  %s0 = inlined_call_operand.hbm [shape: f32[1,8,128], index: 0, kind: input, shape index: {}]
  %s1 = inlined_call_operand.hbm [shape: f32[1,8,128], index: 1, kind: input, shape index: {}]
  %s2 = inlined_call_operand.hbm [shape: f32[8,128], index: 2, kind: output, shape index: {}]
  %s3 = sld [smem:[#allocation0]]
  $region30: #{tpu_custom_call.1} parent=0
    _
  %s5 = ssub.s32 1, %s3
  %s6 = scalar_select 0, %s5, %s3
  $region1: #{tpu_custom_call.1} parent=0
    #allocation2 [shape = 'u8[4096]{0}', space=vmem, size = 0x1000, scoped, tag = 'input window, operand 0, single buffered']
    #allocation3 [shape = 's32[1]{0}', space=sflag, size = 0x4, scoped, tag = 'scoped memory for tpu_custom_call.1']
    #allocation4 [shape = 's32[1]{0}', space=sflag, size = 0x4, scoped, tag = 'scoped memory for tpu_custom_call.1']
    #allocation5 [shape = 'u8[4096]{0}', space=vmem, size = 0x1000, scoped, tag = 'input window, operand 1, single buffered']
    #allocation6 [shape = 's32[1]{0}', space=sflag, size = 0x4, scoped, tag = 'scoped memory for tpu_custom_call.1']
    #allocation7 [shape = 'u8[4096]{0}', space=vmem, size = 0x1000, scoped, tag = 'output window, operand 0, single buffered']
    %7 = vsyncpa [#allocation3], 0
    %8 = vsyncpa [#allocation6], 0
    %9 = vsyncpa [#allocation4], 0
    // Predicated region
    $region2: #{tpu_custom_call.1} parent=1 // pred_check
      _
    $region3: #{tpu_custom_call.1} parent=1 // pred_check_branch
      %11 = sbr.rel (0) target = $region5
    $region4: #{tpu_custom_call.1} parent=1 // pred_region
      %s13 = ssub.s32 128, 128
      %14 = vsyncadd [#allocation3], %s13
      %s16 = sshll.u32 [#allocation2], 4
      %s17 = int_to_ptr.vmem [resolvable:$true] %s16
      %19 = dma.hbm_to_vmem [thread:$0]  %s0, 128, %s17, [#allocation3]
    $region5: #{tpu_custom_call.1} parent=1 // pred_fallthru
      _
    // Predicated region
    $region6: #{tpu_custom_call.1} parent=1 // pred_check
      _
    $region7: #{tpu_custom_call.1} parent=1 // pred_check_branch
      %21 = sbr.rel (0) target = $region9
    $region8: #{tpu_custom_call.1} parent=1 // pred_region
      %s23 = ssub.s32 128, 128
      %24 = vsyncadd [#allocation6], %s23
      %s26 = sshll.u32 [#allocation5], 4
      %s27 = int_to_ptr.vmem [resolvable:$true] %s26
      %29 = dma.hbm_to_vmem [thread:$0]  %s1, 128, %s27, [#allocation6]
    $region9: #{tpu_custom_call.1} parent=1 // pred_fallthru
      _
    // Predicated region
    $region10: #{tpu_custom_call.1} parent=1 // pred_check
      _
    $region11: #{tpu_custom_call.1} parent=1 // pred_check_branch
      %31 = sbr.rel (0) target = $region13
    $region12: #{tpu_custom_call.1} parent=1 // pred_region
      %32 = dma.done [#allocation3], 128
    $region13: #{tpu_custom_call.1} parent=1 // pred_fallthru
      _
    // Predicated region
    $region14: #{tpu_custom_call.1} parent=1 // pred_check
      _
    $region15: #{tpu_custom_call.1} parent=1 // pred_check_branch
      %34 = sbr.rel (0) target = $region17
    $region16: #{tpu_custom_call.1} parent=1 // pred_region
      %35 = dma.done [#allocation6], 128
    $region17: #{tpu_custom_call.1} parent=1 // pred_fallthru
      _
    %p36 = scmp.eq.s32.totalorder 0, 0
    // Predicated region
    $region18: #{tpu_custom_call.1} parent=1 // pred_check
      %p37 = pneg %p36
    $region19: #{tpu_custom_call.1} parent=1 // pred_check_branch
      %39 = sbr.rel (%p37) target = $region21
    $region20: #{tpu_custom_call.1} parent=1 // pred_region
      %40 = vst [vmem:[#allocation7] sm:$0xff] 0.0
    $region21: #{tpu_custom_call.1} parent=1 // pred_fallthru
      _
    %v41 = vld [vmem:[#allocation2] sm:$0xff]
    %v42 = vrsqrt.pop %v41
    %v43 = vmul.f32 %v41, %v42
    %vm44 = vcmp.eq.f32.partialorder %v41, inf
    %v45 = vsel %vm44, %v41, %v43
    %vm46 = vcmp.eq.f32.partialorder %v41, 0.0
    %v47 = vand.u32 %v41, 2147483648
    %v48 = vsel %vm46, %v47, %v45
    %v49 = vld [vmem:[#allocation5] sm:$0xff]
    %v50 = vmul.f32 %v48, %v49
    %v51 = vsub.f32 %v50, 1.0
    %v52 = vld [vmem:[#allocation7] sm:$0xff]
    %v53 = vmul.f32 %v51, %v51
    %v54 = vadd.f32 %v53, 0.0
    %v55 = vadd.f32 %v52, %v54
    %56 = vst [vmem:[#allocation7] sm:$0xff] %v55
    // Predicated region
    $region22: #{tpu_custom_call.1} parent=1 // pred_check
      _
    $region23: #{tpu_custom_call.1} parent=1 // pred_check_branch
      %58 = sbr.rel (0) target = $region25
    $region24: #{tpu_custom_call.1} parent=1 // pred_region
      %s60 = ssub.s32 128, 128
      %61 = vsyncadd [#allocation4], %s60
      %s63 = sshll.u32 [#allocation7], 4
      %s64 = int_to_ptr.vmem [resolvable:$true] %s63
      %66 = dma.vmem_to_hbm [thread:$0]  %s64, 128, %s2, [#allocation4]
    $region25: #{tpu_custom_call.1} parent=1 // pred_fallthru
      _
    // Predicated region
    $region26: #{tpu_custom_call.1} parent=1 // pred_check
      _
    $region27: #{tpu_custom_call.1} parent=1 // pred_check_branch
      %68 = sbr.rel (0) target = $region29
    $region28: #{tpu_custom_call.1} parent=1 // pred_region
      %69 = dma.done [#allocation4], 128
    $region29: #{tpu_custom_call.1} parent=1 // pred_fallthru
      _
    %70 = vsyncpa [#allocation3], 1
    %71 = vsyncpa [#allocation6], 1
    %72 = vsyncpa [#allocation4], 1

</llo_original>
